<compile_context>
chip_gen: v6e
topology: v6e:2x2x1
jax: 0.10.0
libtpu: 0.0.40
codegen_flags: <defaults>
</compile_context>

<pallas_src>
import math
import functools

import jax
import jax.numpy as jnp
from jax import lax
from jax.experimental import pallas as pl
from jax.experimental.pallas import tpu as pltpu

_LOG2E = 1.4426950408889634  # log2(e)


# ---------------------------------------------------------------------------
# Small helpers
# ---------------------------------------------------------------------------

def _pick_tile(dim, cap, mults=(256, 128)):
    """Largest tile <= cap dividing dim, preferring 256-aligned then 128-aligned
    tiles, falling back to the full dimension (always valid for BlockSpecs)."""
    if dim <= cap:
        return dim
    for mult in mults:
        t = (cap // mult) * mult
        while t >= mult:
            if dim % t == 0:
                return t
            t -= mult
    return dim


def _head_group(num_heads, head_dim, gf_cap=512):
    """Heads processed per attention program.  Pick the LARGEST group whose
    width G*F is lane-dense (multiple of 128) and <= gf_cap; this minimizes
    mask re-fetches and grid-step overhead.  Fallback: all heads (full
    d_model block, always a legal BlockSpec)."""
    lane_dense = [g for g in range(1, num_heads + 1)
                  if num_heads % g == 0 and (g * head_dim) % 128 == 0]
    fitting = [g for g in lane_dense if g * head_dim <= gf_cap]
    if fitting:
        return max(fitting)
    if lane_dense:
        return min(lane_dense)
    return num_heads


@functools.lru_cache(maxsize=1)
def _physical_vmem_bytes():
    """Per-core VMEM capacity (v5e/v6e: 128 MiB, v7x: 64 MiB).  Conservative
    fallback if the query is unavailable."""
    try:
        return int(pltpu.get_tpu_info().vmem_capacity_bytes)
    except Exception:  # pragma: no cover - defensive
        return 64 * 2**20


def _vmem_limit(est_bytes):
    """Explicit scoped-VMEM limit: 2x estimated usage, floored at 32 MiB but
    never more than ~70% of physical VMEM (keeps headroom on v7x)."""
    cap = int(0.70 * _physical_vmem_bytes())
    return int(min(cap, max(32 * 2**20, 2 * est_bytes)))


# ---------------------------------------------------------------------------
# Tiled matmul kernels (bf16 operands, f32 accumulation)
# ---------------------------------------------------------------------------

def _matmul_kernel(x_ref, w_ref, o_ref, acc_ref):
    @pl.when(pl.program_id(2) == 0)
    def _():
        acc_ref[...] = jnp.zeros_like(acc_ref)

    acc_ref[...] += jnp.dot(x_ref[...], w_ref[...],
                            preferred_element_type=jnp.float32)

    @pl.when(pl.program_id(2) == pl.num_programs(2) - 1)
    def _():
        o_ref[...] = acc_ref[...].astype(o_ref.dtype)


def _matmul_bias_kernel(x_ref, w_ref, b_ref, o_ref, acc_ref):
    @pl.when(pl.program_id(2) == 0)
    def _():
        acc_ref[...] = jnp.zeros_like(acc_ref)

    acc_ref[...] += jnp.dot(x_ref[...], w_ref[...],
                            preferred_element_type=jnp.float32)

    @pl.when(pl.program_id(2) == pl.num_programs(2) - 1)
    def _():
        o_ref[...] = (acc_ref[...]
                      + b_ref[...].astype(jnp.float32)).astype(o_ref.dtype)


def _pallas_matmul(x, w_t, bias=None, out_dtype=jnp.float32,
                   tm_cap=512, tn_cap=512, tk_cap=512):
    """x: (M, K), w_t: (K, N) pre-transposed weight, optional bias: (1, N)."""
    M, K = x.shape
    K2, N = w_t.shape
    assert K == K2
    tm = _pick_tile(M, tm_cap)
    tn = _pick_tile(N, tn_cap)
    tk = _pick_tile(K, tk_cap)
    grid = (M // tm, N // tn, K // tk)

    in_specs = [pl.BlockSpec((tm, tk), lambda i, j, k: (i, k)),
                pl.BlockSpec((tk, tn), lambda i, j, k: (k, j))]
    operands = [x, w_t]
    if bias is None:
        kernel = _matmul_kernel
    else:
        kernel = _matmul_bias_kernel
        in_specs.append(pl.BlockSpec((1, tn), lambda i, j, k: (0, j)))
        operands.append(bias)

    out_itemsize = jnp.dtype(out_dtype).itemsize
    est = (2 * (tm * tk + tk * tn) * x.dtype.itemsize   # double-buffered inputs
           + tm * tn * 4                                # f32 accumulator
           + 2 * tm * tn * out_itemsize                 # double-buffered output
           + (2 * tn * 4 if bias is not None else 0))

    # x is re-streamed once per N-tile pass, w once per M-tile pass.
    bytes_accessed = (grid[1] * M * K * x.dtype.itemsize
                      + grid[0] * K * N * w_t.dtype.itemsize
                      + M * N * out_itemsize)

    return pl.pallas_call(
        kernel,
        out_shape=jax.ShapeDtypeStruct((M, N), out_dtype),
        grid_spec=pltpu.PrefetchScalarGridSpec(
            num_scalar_prefetch=0,
            grid=grid,
            in_specs=in_specs,
            out_specs=pl.BlockSpec((tm, tn), lambda i, j, k: (i, j)),
            scratch_shapes=[pltpu.VMEM((tm, tn), jnp.float32)]),
        compiler_params=pltpu.CompilerParams(
            dimension_semantics=("parallel", "parallel", "arbitrary"),
            vmem_limit_bytes=_vmem_limit(est)),
        cost_estimate=pl.CostEstimate(
            flops=2 * M * N * K,
            transcendentals=0,
            bytes_accessed=bytes_accessed),
    )(*operands)


# ---------------------------------------------------------------------------
# Flash-style attention kernel (online softmax over Tk blocks, exp2 domain)
# ---------------------------------------------------------------------------

def _mha_flash_kernel(q_ref, k_ref, v_ref, mask_ref, o_ref,
                      m_scr, l_scr, acc_scr,
                      *, heads_per_block, head_dim):
    # Block shapes:
    #   q_ref:    (1, tq, G*F) bf16  (1/sqrt(F)*log2(e) already folded into w_q)
    #   k_ref/v_ref: (1, tk, G*F) bf16
    #   mask_ref: (1, tq, tk)  int8   o_ref: (1, tq, G*F) bf16
    # Scratch:
    #   m_scr/l_scr: (G, tq, 1) f32   acc_scr: (G, tq, F) f32  (head on axis 0
    #   -> the hot read-modify-write never lane-slices at unaligned offsets)
    kv_idx = pl.program_id(3)
    F = heads_per_block and head_dim
    G = heads_per_block

    @pl.when(kv_idx == 0)
    def _():
        m_scr[...] = jnp.full_like(m_scr, -jnp.inf)
        l_scr[...] = jnp.zeros_like(l_scr)
        acc_scr[...] = jnp.zeros_like(acc_scr)

    qg = q_ref[0]                       # (tq, G*F) bf16
    kg = k_ref[0]                       # (tk, G*F) bf16
    vg = v_ref[0]                       # (tk, G*F) bf16
    masked = mask_ref[0] == 0           # (tq, tk) bool

    for h in range(G):
        c0, c1 = h * F, (h + 1) * F
        # q @ k^T, no in-kernel transpose of K (contract last axes).  Scores are
        # already in the exp2 domain (scale * log2e folded into the q weights).
        s = lax.dot_general(qg[:, c0:c1], kg[:, c0:c1],
                            (((1,), (1,)), ((), ())),
                            preferred_element_type=jnp.float32)
        s = jnp.where(masked, jnp.float32(-1e9), s)

        m_prev = m_scr[h]                                       # (tq, 1)
        m_new = jnp.maximum(m_prev, jnp.max(s, axis=-1, keepdims=True))
        alpha = jnp.exp2(m_prev - m_new)
        p = jnp.exp2(s - m_new)                                 # (tq, tk) f32
        l_scr[h] = alpha * l_scr[h] + jnp.sum(p, axis=-1, keepdims=True)
        acc_scr[h] = alpha * acc_scr[h] + jnp.dot(
            p.astype(vg.dtype), vg[:, c0:c1],
            preferred_element_type=jnp.float32)
        m_scr[h] = m_new

    @pl.when(kv_idx == pl.num_programs(3) - 1)
    def _():
        for h in range(G):
            c0, c1 = h * F, (h + 1) * F
            inv = pl.reciprocal(l_scr[h], approx=True)
            o_ref[0, :, c0:c1] = (acc_scr[h] * inv).astype(o_ref.dtype)


def _pallas_flash_attention(q_arr, k_arr, v_arr, mask_i8, num_heads, head_dim,
                            q_slot=0, k_slot=0, v_slot=0,
                            tq_cap=512, tk_cap=1024):
    """q_arr: (B,Tq,*), k_arr/v_arr: (B,Tk,*) bf16, mask_i8: (B,Tq,Tk) int8 ->
    (B,Tq,H*F) bf16.  `*_slot` selects a D-wide column window inside a packed
    projection buffer (0 => columns [0,D), 1 => [D,2D), ...), so fused QKV/KV
    projections feed the kernel directly without HBM slice copies."""
    B, Tq = q_arr.shape[0], q_arr.shape[1]
    Tk = k_arr.shape[1]
    H, F = num_heads, head_dim
    D = H * F
    G = _head_group(H, F)               # heads per program (lane-dense blocks)
    HG = H // G
    gf = G * F
    tq = _pick_tile(Tq, tq_cap)
    tk = _pick_tile(Tk, tk_cap)
    grid = (B, HG, Tq // tq, Tk // tk)

    q_base, k_base, v_base = q_slot * HG, k_slot * HG, v_slot * HG

    kernel = functools.partial(_mha_flash_kernel,
                               heads_per_block=G, head_dim=F)

    est = (2 * (tq * gf * 2 + 2 * tk * gf * 2 + tq * tk + tq * gf * 2)
           + 2 * G * tq * 4 + G * tq * F * 4)

    n_q_passes = Tq // tq               # K/V re-streamed once per q pass
    bytes_accessed = (B * Tq * D * 2
                      + 2 * n_q_passes * B * Tk * D * 2
                      + HG * B * Tq * Tk
                      + B * Tq * D * 2)

    return pl.pallas_call(
        kernel,
        out_shape=jax.ShapeDtypeStruct((B, Tq, D), jnp.bfloat16),
        grid_spec=pltpu.PrefetchScalarGridSpec(
            num_scalar_prefetch=0,
            grid=grid,
            in_specs=[
                pl.BlockSpec((1, tq, gf),
                             lambda b, g, qi, ki: (b, qi, q_base + g)),
                pl.BlockSpec((1, tk, gf),
                             lambda b, g, qi, ki: (b, ki, k_base + g)),
                pl.BlockSpec((1, tk, gf),
                             lambda b, g, qi, ki: (b, ki, v_base + g)),
                pl.BlockSpec((1, tq, tk),
                             lambda b, g, qi, ki: (b, qi, ki)),
            ],
            out_specs=pl.BlockSpec((1, tq, gf),
                                   lambda b, g, qi, ki: (b, qi, g)),
            scratch_shapes=[
                pltpu.VMEM((G, tq, 1), jnp.float32),    # running max m
                pltpu.VMEM((G, tq, 1), jnp.float32),    # running denom l
                pltpu.VMEM((G, tq, F), jnp.float32),    # output accumulator
            ]),
        compiler_params=pltpu.CompilerParams(
            dimension_semantics=("parallel", "parallel", "parallel",
                                 "arbitrary"),
            vmem_limit_bytes=_vmem_limit(est)),
        cost_estimate=pl.CostEstimate(
            flops=4 * B * H * Tq * Tk * F,
            transcendentals=B * H * Tq * Tk,
            bytes_accessed=bytes_accessed),
    )(q_arr, k_arr, v_arr, mask_i8)


# ---------------------------------------------------------------------------
# MultiHeadAttention forward (matches torch module semantics)
# ---------------------------------------------------------------------------

class MultiHeadAttentionPallas:
    def __init__(self, d_model, num_heads, key):
        assert d_model % num_heads == 0
        self.d_model = d_model
        self.num_heads = num_heads
        self.features = d_model // num_heads

        k1, k2, k3, k4, k5 = jax.random.split(key, 5)
        bound = 1.0 / math.sqrt(d_model)
        init = lambda kk, shape: jax.random.uniform(
            kk, shape, jnp.float32, minval=-bound, maxval=bound)
        # f32 masters in torch layout (out_features, in_features) -- used by the
        # reference; kernels use pre-transposed bf16 copies built once here.
        self.w_q = init(k1, (num_heads * self.features, d_model))
        self.w_k = init(k2, (num_heads * self.features, d_model))
        self.w_v = init(k3, (num_heads * self.features, d_model))
        self.w_o = init(k4, (d_model, num_heads * self.features))
        self.b_o = init(k5, (d_model,))

        # Fold softmax scale and log2(e) into the q weights: the flash kernel
        # then works purely in the exp2 domain with no per-score multiplies.
        sm_scale = (1.0 / math.sqrt(self.features)) * _LOG2E
        self.w_q_scaled_t = (self.w_q.T * sm_scale).astype(jnp.bfloat16)
        self.w_k_t = self.w_k.T.astype(jnp.bfloat16)
        self.w_v_t = self.w_v.T.astype(jnp.bfloat16)
        self.w_o_t = self.w_o.T.astype(jnp.bfloat16)
        # Fused weights for the packed fast paths.
        self.w_qkv_t = jnp.concatenate(
            [self.w_q_scaled_t, self.w_k_t, self.w_v_t], axis=1)  # (D, 3D)
        self.w_kv_t = jnp.concatenate(
            [self.w_k_t, self.w_v_t], axis=1)                     # (D, 2D)
        self.b_o_2d = self.b_o.reshape(1, d_model)

    def __call__(self, k, q, v, mask):
        B = q.shape[0]
        Tq, Tk, Tv = q.shape[1], k.shape[1], v.shape[1]
        assert Tk == Tv, "K and V must have the same number of tokens"
        H, F, D = self.num_heads, self.features, self.d_model

        xq = q.reshape(B * Tq, D).astype(jnp.bfloat16)
        mask_i8 = (mask != 0).astype(jnp.int8)

        # Packed paths are only legal when the head-group width is lane-dense;
        # otherwise the attention BlockSpecs need the full last dim per tensor.
        gf = _head_group(H, F) * F
        packed_ok = (gf % 128 == 0)

        if (q is k) and (k is v):
            # Self-attention: one fused matmul reads the activation once; the
            # packed (B,Tq,3D) result feeds attention directly (no HBM slices).
            qkv = _pallas_matmul(xq, self.w_qkv_t,
                                 out_dtype=jnp.bfloat16).reshape(B, Tq, 3 * D)
            if packed_ok:
                attn = _pallas_flash_attention(qkv, qkv, qkv, mask_i8, H, F,
                                               q_slot=0, k_slot=1, v_slot=2)
            else:
                attn = _pallas_flash_attention(
                    qkv[..., :D], qkv[..., D:2 * D], qkv[..., 2 * D:],
                    mask_i8, H, F)
        elif k is v:
            # Shared K/V source (typical encoder-decoder cross attention):
            # fuse the K and V projections, read the encoder activation once.
            xk = k.reshape(B * Tk, D).astype(jnp.bfloat16)
            qp = _pallas_matmul(xq, self.w_q_scaled_t,
                                out_dtype=jnp.bfloat16).reshape(B, Tq, D)
            kv = _pallas_matmul(xk, self.w_kv_t,
                                out_dtype=jnp.bfloat16).reshape(B, Tk, 2 * D)
            if packed_ok:
                attn = _pallas_flash_attention(qp, kv, kv, mask_i8, H, F,
                                               q_slot=0, k_slot=0, v_slot=1)
            else:
                attn = _pallas_flash_attention(qp, kv[..., :D], kv[..., D:],
                                               mask_i8, H, F)
        else:
            xk = k.reshape(B * Tk, D).astype(jnp.bfloat16)
            xv = v.reshape(B * Tv, D).astype(jnp.bfloat16)
            qp = _pallas_matmul(xq, self.w_q_scaled_t, out_dtype=jnp.bfloat16)
            kp = _pallas_matmul(xk, self.w_k_t, out_dtype=jnp.bfloat16)
            vp = _pallas_matmul(xv, self.w_v_t, out_dtype=jnp.bfloat16)
            attn = _pallas_flash_attention(qp.reshape(B, Tq, D),
                                           kp.reshape(B, Tk, D),
                                           vp.reshape(B, Tv, D),
                                           mask_i8, H, F)

        out = _pallas_matmul(attn.reshape(B * Tq, D), self.w_o_t,
                             bias=self.b_o_2d, out_dtype=jnp.float32)
        return out.reshape(B, Tq, D)


# ---------------------------------------------------------------------------
# Pure-JAX reference (mirrors the bf16-operand / f32-accumulate quantization)
# ---------------------------------------------------------------------------

def _reference_forward(mha, k, q, v, mask):
    bf = lambda a: a.astype(jnp.bfloat16).astype(jnp.float32)
    B, Tq, _ = q.shape
    Tk = k.shape[1]
    H, F = mha.num_heads, mha.features
    qp = bf(jnp.dot(bf(q), bf(mha.w_q.T)))
    kp = bf(jnp.dot(bf(k), bf(mha.w_k.T)))
    vp = bf(jnp.dot(bf(v), bf(mha.w_v.T)))
    qh = qp.reshape(B, Tq, H, F).transpose(0, 2, 1, 3)
    kh = kp.reshape(B, Tk, H, F).transpose(0, 2, 1, 3)
    vh = vp.reshape(B, Tk, H, F).transpose(0, 2, 1, 3)
    s = jnp.einsum("bhqf,bhkf->bhqk", qh, kh) / math.sqrt(F)
    s = jnp.where(mask[:, None, :, :] == 0, -1e9, s)
    p = jax.nn.softmax(s, axis=-1)
    o = jnp.einsum("bhqk,bhkf->bhqf", bf(p), vh)
    o = bf(o.transpose(0, 2, 1, 3).reshape(B, Tq, H * F))
    return jnp.dot(o, bf(mha.w_o.T)) + mha.b_o


if __name__ == "__main__":
    key = jax.random.PRNGKey(0)
    kk_, kq_, kv_, kparams = jax.random.split(key, 4)

    B, T, d_model, num_heads = 2, 8, 32, 4

    q = jax.random.normal(kq_, (B, T, d_model), jnp.float32)
    k = jax.random.normal(kk_, (B, T, d_model), jnp.float32)
    v = jax.random.normal(kv_, (B, T, d_model), jnp.float32)
    # causal mask (1 = attend, 0 = masked), broadcast over heads
    mask = jnp.tril(jnp.ones((T, T), jnp.float32))[None].repeat(B, axis=0)

    mha = MultiHeadAttentionPallas(d_model, num_heads, kparams)

    # Cross-attention (distinct q/k/v): separate projection path.
    out = jax.block_until_ready(mha(k, q, v, mask))
    ref = _reference_forward(mha, k, q, v, mask)
    assert out.shape == (B, T, d_model)
    assert jnp.allclose(out, ref, atol=3e-2, rtol=3e-2), "mismatch (cross)"

    # Self-attention (q is k is v): exercises the fused QKV projection.
    out_sa = jax.block_until_ready(mha(q, q, q, mask))
    ref_sa = _reference_forward(mha, q, q, q, mask)
    assert jnp.allclose(out_sa, ref_sa, atol=3e-2, rtol=3e-2), "mismatch (self)"

    # Shared K/V source (k is v, q distinct): exercises the fused KV projection.
    out_kv = jax.block_until_ready(mha(k, q, k, mask))
    ref_kv = _reference_forward(mha, k, q, k, mask)
    assert jnp.allclose(out_kv, ref_kv, atol=3e-2, rtol=3e-2), "mismatch (kv)"

    print("KERNEL_OK")
</pallas_src>

<mosaic_0001>
module attributes {stable_mosaic.version = 11 : i64} {
  func.func @_matmul_kernel(%arg0: i32, %arg1: i32, %arg2: i32, %arg3: memref<16x32xbf16, #tpu.memory_space<vmem>>, %arg4: memref<32x32xbf16, #tpu.memory_space<vmem>>, %arg5: memref<16x32xbf16, #tpu.memory_space<vmem>>, %arg6: memref<16x32xf32, #tpu.memory_space<vmem>>) attributes {dimension_semantics = [#tpu.dimension_semantics<parallel>, #tpu.dimension_semantics<parallel>, #tpu.dimension_semantics<arbitrary>], iteration_bounds = array<i64: 1, 1, 1>, scalar_prefetch = 0 : i64, scratch_operands = 1 : i64, tpu.core_type = #tpu.core_type<tc>, window_params = [{transform_indices = @transform_0, window_bounds = array<i64: 16, 32>}, {transform_indices = @transform_1, window_bounds = array<i64: 32, 32>}, {transform_indices = @transform_2, window_bounds = array<i64: 16, 32>}]} {
    %c0_i32 = arith.constant 0 : i32
    %0 = arith.cmpi eq, %arg2, %c0_i32 : i32
    %1 = arith.extui %0 : i1 to i32
    %c0_i32_0 = arith.constant 0 : i32
    %2 = arith.cmpi ne, %1, %c0_i32_0 : i32
    scf.if %2 {
      %cst_10 = arith.constant 0.000000e+00 : f32
      %12 = vector.broadcast %cst_10 : f32 to vector<16x32xf32>
      %c0_11 = arith.constant 0 : index
      %c0_12 = arith.constant 0 : index
      %13 = vector.load %arg6[%c0_11, %c0_12] : memref<16x32xf32, #tpu.memory_space<vmem>>, vector<16x32xf32>
      tpu.vector_store %arg6[%c0_11, %c0_12], %12 {strides = array<i32>} : memref<16x32xf32, #tpu.memory_space<vmem>>, vector<16x32xf32>,
    } else {
    }
    %c0 = arith.constant 0 : index
    %c0_1 = arith.constant 0 : index
    %3 = vector.load %arg6[%c0, %c0_1] : memref<16x32xf32, #tpu.memory_space<vmem>>, vector<16x32xf32>
    %c0_2 = arith.constant 0 : index
    %c0_3 = arith.constant 0 : index
    %4 = vector.load %arg3[%c0_2, %c0_3] : memref<16x32xbf16, #tpu.memory_space<vmem>>, vector<16x32xbf16>
    %c0_4 = arith.constant 0 : index
    %c0_5 = arith.constant 0 : index
    %5 = vector.load %arg4[%c0_4, %c0_5] : memref<32x32xbf16, #tpu.memory_space<vmem>>, vector<32x32xbf16>
    %cst = arith.constant dense<0.000000e+00> : vector<16x32xf32>
    %6 = tpu.matmul %4, %5, %cst {dimension_numbers = #tpu.dot_dimension_numbers<[1], [0], [0], [1], [0, 0, 1, 1], [], []>} : vector<16x32xbf16>, vector<32x32xbf16>, vector<16x32xf32> -> vector<16x32xf32>
    %7 = arith.addf %3, %6 : vector<16x32xf32>
    %c0_6 = arith.constant 0 : index
    %c0_7 = arith.constant 0 : index
    %8 = vector.load %arg6[%c0_6, %c0_7] : memref<16x32xf32, #tpu.memory_space<vmem>>, vector<16x32xf32>
    tpu.vector_store %arg6[%c0_6, %c0_7], %7 {strides = array<i32>} : memref<16x32xf32, #tpu.memory_space<vmem>>, vector<16x32xf32>,
    %c0_i32_8 = arith.constant 0 : i32
    %9 = arith.cmpi eq, %arg2, %c0_i32_8 : i32
    %10 = arith.extui %9 : i1 to i32
    %c0_i32_9 = arith.constant 0 : i32
    %11 = arith.cmpi ne, %10, %c0_i32_9 : i32
    scf.if %11 {
      %c0_10 = arith.constant 0 : index
      %c0_11 = arith.constant 0 : index
      %12 = vector.load %arg6[%c0_10, %c0_11] : memref<16x32xf32, #tpu.memory_space<vmem>>, vector<16x32xf32>
      %13 = arith.truncf %12 : vector<16x32xf32> to vector<16x32xbf16>
      %c0_12 = arith.constant 0 : index
      %c0_13 = arith.constant 0 : index
      %14 = vector.load %arg5[%c0_12, %c0_13] : memref<16x32xbf16, #tpu.memory_space<vmem>>, vector<16x32xbf16>
      tpu.vector_store %arg5[%c0_12, %c0_13], %13 {strides = array<i32>} : memref<16x32xbf16, #tpu.memory_space<vmem>>, vector<16x32xbf16>,
    } else {
    }
    return
  }
  func.func @transform_0(%arg0: i32, %arg1: i32, %arg2: i32) -> (i32, i32) {
    %c0_i32 = arith.constant 0 : i32
    return %arg0, %arg2 : i32, i32
  }
  func.func @transform_1(%arg0: i32, %arg1: i32, %arg2: i32) -> (i32, i32) {
    %c0_i32 = arith.constant 0 : i32
    return %arg2, %arg1 : i32, i32
  }
  func.func @transform_2(%arg0: i32, %arg1: i32, %arg2: i32) -> (i32, i32) {
    %c0_i32 = arith.constant 0 : i32
    return %arg0, %arg1 : i32, i32
  }
}

</mosaic_0001>

<llo_original>
// kernel: tpu_custom_call.1
$region0: #{tpu_custom_call.1}
  #allocation0 [shape = 'u32[]', space=smem, size = 0x4, offset = 0x4, fixed_abs, tag = 'smem constant byte address 0x4 - core index']
  #allocation1 [shape = 'u32[144,128]{1,0:T(1,128)}', space=vmem, size = 0x12000, scoped, tag = 'internal scratch']
  #allocation2 [shape = 'f32[16,32]{1,0:T(8,128)}', space=vmem, size = 0x2000, scoped, tag = 'scratch operand']
  %s0 = inlined_call_operand.hbm [shape: bf16[16,32], index: 0, kind: input, shape index: {}]
  %s1 = inlined_call_operand.hbm [shape: bf16[32,32], index: 1, kind: input, shape index: {}]
  %s2 = inlined_call_operand.hbm [shape: bf16[16,32], index: 2, kind: output, shape index: {}]
  %s3 = sld [smem:[#allocation0]]
  $region34: #{tpu_custom_call.1} parent=0
    _
  %s5 = ssub.s32 1, %s3
  %s6 = scalar_select 0, %s5, %s3
  $region1: #{tpu_custom_call.1} parent=0
    #allocation3 [shape = 'u8[4096]{0}', space=vmem, size = 0x1000, scoped, tag = 'input window, operand 0, single buffered']
    #allocation4 [shape = 's32[1]{0}', space=sflag, size = 0x4, scoped, tag = 'scoped memory for tpu_custom_call.1']
    #allocation5 [shape = 's32[1]{0}', space=sflag, size = 0x4, scoped, tag = 'scoped memory for tpu_custom_call.1']
    #allocation6 [shape = 'u8[8192]{0}', space=vmem, size = 0x2000, scoped, tag = 'input window, operand 1, single buffered']
    #allocation7 [shape = 's32[1]{0}', space=sflag, size = 0x4, scoped, tag = 'scoped memory for tpu_custom_call.1']
    #allocation8 [shape = 'u8[4096]{0}', space=vmem, size = 0x1000, scoped, tag = 'output window, operand 0, single buffered']
    %7 = vsyncpa [#allocation4], 0
    %8 = vsyncpa [#allocation7], 0
    %9 = vsyncpa [#allocation5], 0
    // Predicated region
    $region2: #{tpu_custom_call.1} parent=1 // pred_check
      _
    $region3: #{tpu_custom_call.1} parent=1 // pred_check_branch
      %11 = sbr.rel (0) target = $region5
    $region4: #{tpu_custom_call.1} parent=1 // pred_region
      %s13 = ssub.s32 128, 128
      %14 = vsyncadd [#allocation4], %s13
      %s15 = sshll.u32 [#allocation3], 4
      %s16 = int_to_ptr.vmem [resolvable:$true] %s15
      %21 = dma.hbm_to_vmem [thread:$0]  %s0, 128, %s16, [#allocation4], 64, 64, 4
    $region5: #{tpu_custom_call.1} parent=1 // pred_fallthru
      _
    // Predicated region
    $region6: #{tpu_custom_call.1} parent=1 // pred_check
      _
    $region7: #{tpu_custom_call.1} parent=1 // pred_check_branch
      %23 = sbr.rel (0) target = $region9
    $region8: #{tpu_custom_call.1} parent=1 // pred_region
      %s25 = ssub.s32 256, 256
      %26 = vsyncadd [#allocation7], %s25
      %s27 = sshll.u32 [#allocation6], 4
      %s28 = int_to_ptr.vmem [resolvable:$true] %s27
      %33 = dma.hbm_to_vmem [thread:$0]  %s1, 256, %s28, [#allocation7], 64, 64, 4
    $region9: #{tpu_custom_call.1} parent=1 // pred_fallthru
      _
    // Predicated region
    $region10: #{tpu_custom_call.1} parent=1 // pred_check
      _
    $region11: #{tpu_custom_call.1} parent=1 // pred_check_branch
      %35 = sbr.rel (0) target = $region13
    $region12: #{tpu_custom_call.1} parent=1 // pred_region
      %36 = dma.done [#allocation4], 128
    $region13: #{tpu_custom_call.1} parent=1 // pred_fallthru
      _
    // Predicated region
    $region14: #{tpu_custom_call.1} parent=1 // pred_check
      _
    $region15: #{tpu_custom_call.1} parent=1 // pred_check_branch
      %38 = sbr.rel (0) target = $region17
    $region16: #{tpu_custom_call.1} parent=1 // pred_region
      %39 = dma.done [#allocation7], 256
    $region17: #{tpu_custom_call.1} parent=1 // pred_fallthru
      _
    %p41 = scmp.eq.s32.totalorder 0, 0
    // Predicated region
    $region18: #{tpu_custom_call.1} parent=1 // pred_check
      %p42 = pneg %p41
    $region19: #{tpu_custom_call.1} parent=1 // pred_check_branch
      %44 = sbr.rel (%p42) target = $region21
    $region20: #{tpu_custom_call.1} parent=1 // pred_region
      %vm45 = vcmask 261120
      %46 = vst.msk [vmem:[#allocation2] sm:$0xff] %vm45, 0.0
      %47 = vst.msk [vmem:[#allocation2 + $0x8] sm:$0xff] %vm45, 0.0
    $region21: #{tpu_custom_call.1} parent=1 // pred_fallthru
      _
    %v48 = vld [vmem:[#allocation2] sm:$0xff]
    %v49 = vld [vmem:[#allocation2 + $0x8] sm:$0xff]
    %v50 = vld [vmem:[#allocation3] sm:$0xf]
    %v51 = vld [vmem:[#allocation3 + $0x4] sm:$0xf]
    %v52 = vld [vmem:[#allocation6] sm:$0xf]
    %v53 = vld [vmem:[#allocation6 + $0x4] sm:$0xf]
    %v54 = vld [vmem:[#allocation6 + $0x8] sm:$0xf]
    %v55 = vld [vmem:[#allocation6 + $0xc] sm:$0xf]
    %v58 = vunpack.c.l.b16 %v50
    %v59 = vunpack.c.l.b16 %v51
    %v60 = vpack.c.b16 %v59, %v58
    %v65 = vunpack.c.l.b16 %v52
    %v66 = vunpack.c.l.b16 %v53
    %v67 = vunpack.c.l.b16 %v54
    %v68 = vunpack.c.l.b16 %v55
    %v69 = vpack.c.b16 %v66, %v65
    %v70 = vpack.c.b16 %v68, %v67
    %vm73 = vcmask 261120
    %v75 = vsel %vm73, %v60, 0
    %77 = vmatprep.subr.bf16.mxu0 0
    %78 = vmatpush1.bf16.msra.mxu0 0
    %79 = vmatprep.subr.bf16.mxu0 0
    %80 = vmatpush1.bf16.msra.mxu0 0
    %81 = vmatprep.subr.bf16.mxu0 0
    %82 = vmatpush1.bf16.msra.mxu0 0
    %83 = vmatprep.subr.bf16.mxu0 0
    %84 = vmatpush1.bf16.msra.mxu0 0
    %85 = vmatprep.subr.bf16.mxu0 0
    %86 = vmatpush1.bf16.msra.mxu0 0
    %87 = vmatprep.subr.bf16.mxu0 0
    %88 = vmatpush1.bf16.msra.mxu0 0
    %89 = vmatprep.subr.bf16.mxu0 0
    %90 = vmatpush1.bf16.msra.mxu0 %v70
    %91 = vmatprep.subr.bf16.mxu0 0
    %92 = vmatpush1.bf16.msra.mxu0 %v69
    %93 = vmatprep.subr.bf16.mxu0 0
    %94 = vmatpush2.bf16.msra.mxu0 0
    %95 = vmatprep.subr.bf16.mxu0 0
    %96 = vmatpush2.bf16.msra.mxu0 0
    %97 = vmatprep.subr.bf16.mxu0 0
    %98 = vmatpush2.bf16.msra.mxu0 0
    %99 = vmatprep.subr.bf16.mxu0 0
    %100 = vmatpush2.bf16.msra.mxu0 0
    %101 = vmatprep.subr.bf16.mxu0 0
    %102 = vmatpush2.bf16.msra.mxu0 0
    %103 = vmatprep.subr.bf16.mxu0 0
    %104 = vmatpush2.bf16.msra.mxu0 0
    %105 = vmatprep.subr.bf16.mxu0 0
    %106 = vmatpush2.bf16.msra.mxu0 0
    %107 = vmatprep.subr.bf16.mxu0 0
    %108 = vmatpush2.bf16.msra.mxu0 0
    %109 = vmatprep.mubr.bf16.mxu0 0
    %110 = vmatmul.mubr.bf16.gmra.mxu0 %v75
    %v111 = vpop.f32.mrf.mxu0
    %v112 = vadd.f32 0.0, %v111
    %v113 = vpop.f32.mrf.mxu0
    %v114 = vpop.f32.mrf.mxu0
    %v115 = vadd.f32 0.0, %v114
    %v116 = vpop.f32.mrf.mxu0
    %117 = vdwg.mxu0
    %v118 = vadd.f32 %v48, %v112
    %v119 = vadd.f32 %v49, %v115
    %120 = vst.msk [vmem:[#allocation2] sm:$0xff] %vm73, %v118
    %121 = vst.msk [vmem:[#allocation2 + $0x8] sm:$0xff] %vm73, %v119
    // Predicated region
    $region22: #{tpu_custom_call.1} parent=1 // pred_check
      %p122 = pneg %p41
    $region23: #{tpu_custom_call.1} parent=1 // pred_check_branch
      %124 = sbr.rel (%p122) target = $region25
    $region24: #{tpu_custom_call.1} parent=1 // pred_region
      %v125 = vld [vmem:[#allocation2] sm:$0xff]
      %v126 = vld [vmem:[#allocation2 + $0x8] sm:$0xff]
      %v127 = vpack.c.bf16 %v126, %v125
      %v129 = vunpack.c.l.b16 %v127
      %v130 = vunpack.c.h.b16 %v127
      %v131 = vpack.c.b16 %v129, %v129
      %v132 = vpack.c.b16 %v130, %v130
      %vm135 = vcmask 257024
      %136 = vst.msk [vmem:[#allocation8] sm:$0xf] %vm135, %v131
      %137 = vst.msk [vmem:[#allocation8 + $0x4] sm:$0xf] %vm135, %v132
    $region25: #{tpu_custom_call.1} parent=1 // pred_fallthru
      _
    // Predicated region
    $region26: #{tpu_custom_call.1} parent=1 // pred_check
      _
    $region27: #{tpu_custom_call.1} parent=1 // pred_check_branch
      %139 = sbr.rel (0) target = $region29
    $region28: #{tpu_custom_call.1} parent=1 // pred_region
      %s141 = ssub.s32 128, 128
      %142 = vsyncadd [#allocation5], %s141
      %s143 = sshll.u32 [#allocation8], 4
      %s144 = int_to_ptr.vmem [resolvable:$true] %s143
      %149 = dma.vmem_to_hbm [thread:$0]  %s144, 128, %s2, [#allocation5], 64, 64, 4
    $region29: #{tpu_custom_call.1} parent=1 // pred_fallthru
      _
    // Predicated region
    $region30: #{tpu_custom_call.1} parent=1 // pred_check
      _
    $region31: #{tpu_custom_call.1} parent=1 // pred_check_branch
      %151 = sbr.rel (0) target = $region33
    $region32: #{tpu_custom_call.1} parent=1 // pred_region
      %152 = dma.done [#allocation5], 128
    $region33: #{tpu_custom_call.1} parent=1 // pred_fallthru
      _
    %153 = vsyncpa [#allocation4], 1
    %154 = vsyncpa [#allocation7], 1
    %155 = vsyncpa [#allocation5], 1

</llo_original>
